<compile_context>
chip_gen: v7x
topology: tpu7x:2x2x1
jax: 0.10.0
libtpu: 0.0.40
codegen_flags: <defaults>
</compile_context>

<pallas_src>
import functools

import jax
import jax.numpy as jnp
from jax import lax
from jax.experimental import pallas as pl
from jax.experimental.pallas import tpu as pltpu


_LANES = 128


def _round_up(x, m):
    return (x + m - 1) // m * m


def _pick_tile_h(Ho, Wp, Wo, Cin, Cp, K, in_itemsize, out_itemsize,
                 budget_bytes=32 * 1024 * 1024):
    """Largest divisor of Ho whose double-buffered in/out blocks (+ f32 acc) fit budget."""
    best = 1
    for th in range(1, Ho + 1):
        if Ho % th:
            continue
        in_blk = (th + K - 1) * Wp * Cin * in_itemsize
        out_blk = th * Wo * Cp * out_itemsize
        acc = th * Wo * Cin * 4
        if 2 * (in_blk + out_blk) + acc <= budget_bytes:
            best = th
    return best


def _dwpw_kernel(x_ref, dw_w_ref, pw_w_ref, pw_b_ref, o_ref,
                 *, K, TH, Wo, Cin, Cp, mxu_dtype):
    """One (batch, row-tile) per grid step.

    x_ref   : (1, 1, TH+K-1, Wp, Cin)  halo'd NHWC input row tile
    dw_w_ref: (K, K, Cin)              depthwise weights
    pw_w_ref: (Cin, Cp)                pointwise weights (Cout zero-padded to Cp)
    pw_b_ref: (1, Cp)                  folded bias (dw_b @ pw_w + pw_b, padded)
    o_ref   : (1, TH, Wo, Cp)          NHWC output row tile (lane-dense Cp)
    """
    dw_w = dw_w_ref[...].astype(jnp.float32)           # hoisted cast, (K, K, Cin)

    # Depthwise conv on the VPU in f32.  One sublane-offset load per kw; the kh
    # taps slice the leading (non-layout) dim of the loaded value (free).
    acc = jnp.zeros((TH, Wo, Cin), jnp.float32)
    for kw in range(K):                                 # static Python loops, K*K small
        xs = x_ref[0, 0, :, kw:kw + Wo, :].astype(jnp.float32)    # (TH+K-1, Wo, Cin)
        for kh in range(K):
            acc = acc + xs[kh:kh + TH] * dw_w[kh, kw][None, None, :]

    # Pointwise 1x1 conv: flatten rows -> MXU matmul with bf16 operands and f32
    # accumulation.  N = Cp is a multiple of 128 -> unmasked lane-dense stores.
    flat = acc.reshape(TH * Wo, Cin).astype(mxu_dtype)
    out = jnp.dot(flat, pw_w_ref[...].astype(mxu_dtype),
                  preferred_element_type=jnp.float32)
    out = out + pw_b_ref[0, :][None, :]
    o_ref[0] = out.reshape(TH, Wo, Cp).astype(o_ref.dtype)


def depthwise_conv(x_nchw, dw_w_oihw, dw_b, pw_w_oihw, pw_b, *,
                   padding, stride=1, mxu_dtype=jnp.bfloat16):
    """Matches: Conv2d(Cin,Cin,K,stride,pad,groups=Cin) -> Conv2d(Cin,Cout,1)."""
    # TODO(synk): general stride would need strided windows inside the kernel.
    assert stride == 1, "only stride=1 implemented in the Pallas kernel"

    B, Cin, H, W = x_nchw.shape
    Cout = pw_w_oihw.shape[0]
    K = dw_w_oihw.shape[2]
    Hp, Wp = H + 2 * padding, W + 2 * padding
    Ho, Wo = Hp - K + 1, Wp - K + 1

    # ---- layout plumbing (plain JAX; fuses into one HBM pass) -------------------
    x_nhwc = jnp.transpose(x_nchw, (0, 2, 3, 1))
    x_pad = jnp.pad(x_nhwc, ((0, 0), (padding, padding), (padding, padding), (0, 0)))

    # Lane-dense output: pad Cout up to a multiple of 128 (sliced off afterwards).
    Cp = _round_up(Cout, _LANES)

    # Row-tile height sized for a conservative per-generation VMEM budget.
    itemsize = jnp.dtype(x_nchw.dtype).itemsize
    TH = _pick_tile_h(Ho, Wp, Wo, Cin, Cp, K, itemsize, itemsize)
    T = Ho // TH
    TH_in = TH + K - 1

    # Overlapping (halo) row tiles, built in the wrapper so the kernel uses plain
    # Blocked BlockSpecs with automatic double buffering: tile t holds padded rows
    # [t*TH, t*TH + TH + K - 1).
    row_idx = (jnp.arange(T) * TH)[:, None] + jnp.arange(TH_in)[None, :]
    x_tiles = x_pad[:, row_idx, :, :]                   # (B, T, TH_in, Wp, Cin)

    # PyTorch weight layouts -> kernel layouts; fold the depthwise bias into the
    # pointwise bias (the 1x1 conv is linear): pw_b_eff = dw_b @ pw_w + pw_b.
    dw_w = jnp.transpose(dw_w_oihw[:, 0, :, :], (1, 2, 0)).astype(jnp.float32)  # (K,K,Cin)
    pw_w = jnp.transpose(pw_w_oihw[:, :, 0, 0], (1, 0)).astype(jnp.float32)     # (Cin,Cout)
    pw_b_eff = dw_b.astype(jnp.float32) @ pw_w + pw_b.astype(jnp.float32)       # (Cout,)
    pw_w_p = jnp.pad(pw_w, ((0, 0), (0, Cp - Cout)))
    pw_b_p = jnp.pad(pw_b_eff, (0, Cp - Cout)).reshape(1, Cp)

    kernel = functools.partial(_dwpw_kernel, K=K, TH=TH, Wo=Wo,
                               Cin=Cin, Cp=Cp, mxu_dtype=mxu_dtype)

    flops = 2 * B * Ho * Wo * Cin * (K * K + Cp)
    bytes_accessed = (x_tiles.size * itemsize + B * Ho * Wo * Cp * itemsize
                      + dw_w.size * 4 + pw_w_p.size * 4 + pw_b_p.size * 4)

    out_nhwc = pl.pallas_call(
        kernel,
        out_shape=jax.ShapeDtypeStruct((B, Ho, Wo, Cp), x_nchw.dtype),
        grid=(B, T),
        in_specs=[
            pl.BlockSpec((1, 1, TH_in, Wp, Cin), lambda b, t: (b, t, 0, 0, 0)),
            pl.BlockSpec((K, K, Cin), lambda b, t: (0, 0, 0)),
            pl.BlockSpec((Cin, Cp), lambda b, t: (0, 0)),
            pl.BlockSpec((1, Cp), lambda b, t: (0, 0)),
        ],
        out_specs=pl.BlockSpec((1, TH, Wo, Cp), lambda b, t: (b, t, 0, 0)),
        compiler_params=pltpu.CompilerParams(
            dimension_semantics=("parallel", "parallel"),   # megacore-friendly
            vmem_limit_bytes=48 * 1024 * 1024),              # fits v7x's 64 MiB VMEM
        cost_estimate=pl.CostEstimate(flops=flops, transcendentals=0,
                                      bytes_accessed=bytes_accessed),
    )(x_tiles, dw_w, pw_w_p, pw_b_p)

    # Slice off channel padding, NHWC -> NCHW to match PyTorch output convention.
    return jnp.transpose(out_nhwc[..., :Cout], (0, 3, 1, 2))


def _reference(x, dw_w, dw_b, pw_w, pw_b, *, padding, stride):
    """Pure-JAX reference via lax.conv_general_dilated (NCHW / OIHW)."""
    Cin = x.shape[1]
    dn = ('NCHW', 'OIHW', 'NCHW')
    y = lax.conv_general_dilated(x, dw_w, window_strides=(stride, stride),
                                 padding=[(padding, padding), (padding, padding)],
                                 dimension_numbers=dn, feature_group_count=Cin)
    y = y + dw_b[None, :, None, None]
    z = lax.conv_general_dilated(y, pw_w, window_strides=(1, 1),
                                 padding=[(0, 0), (0, 0)], dimension_numbers=dn)
    return z + pw_b[None, :, None, None]


if __name__ == "__main__":
    B, Cin, H, W = 2, 4, 16, 16
    Cout, K, pad, stride = 8, 3, 1, 1

    key = jax.random.PRNGKey(0)
    k0, k1, k2, k3, k4 = jax.random.split(key, 5)
    x = jax.random.normal(k0, (B, Cin, H, W), jnp.float32)
    # Deterministic synthetic params (shapes follow nn.Conv2d in __init__).
    dw_w = jax.random.normal(k1, (Cin, 1, K, K), jnp.float32) * 0.2   # groups=Cin
    dw_b = jax.random.normal(k2, (Cin,), jnp.float32) * 0.1
    pw_w = jax.random.normal(k3, (Cout, Cin, 1, 1), jnp.float32) * 0.2
    pw_b = jax.random.normal(k4, (Cout,), jnp.float32) * 0.1

    out = depthwise_conv(x, dw_w, dw_b, pw_w, pw_b, padding=pad, stride=stride)
    out = jax.block_until_ready(out)

    ref = _reference(x, dw_w, dw_b, pw_w, pw_b, padding=pad, stride=stride)
    assert out.shape == (B, Cout, H, W), out.shape
    # Tolerance accounts for bf16 MXU operands in the 1x1 conv (f32 accumulation).
    err = float(jnp.max(jnp.abs(out - ref)))
    assert jnp.allclose(out, ref, atol=2e-2, rtol=2e-2), err
    print("KERNEL_OK")
</pallas_src>

<mosaic_0001>
module attributes {stable_mosaic.version = 11 : i64} {
  func.func @_dwpw_kernel(%arg0: i32, %arg1: i32, %arg2: memref<1x1x18x18x4xf32, #tpu.memory_space<vmem>>, %arg3: memref<3x3x4xf32, #tpu.memory_space<vmem>>, %arg4: memref<4x128xf32, #tpu.memory_space<vmem>>, %arg5: memref<1x128xf32, #tpu.memory_space<vmem>>, %arg6: memref<1x16x16x128xf32, #tpu.memory_space<vmem>>) attributes {dimension_semantics = [#tpu.dimension_semantics<parallel>, #tpu.dimension_semantics<parallel>], iteration_bounds = array<i64: 2, 1>, scalar_prefetch = 0 : i64, scratch_operands = 0 : i64, tpu.core_type = #tpu.core_type<tc>, window_params = [{transform_indices = @transform_0, window_bounds = array<i64: 1, 1, 18, 18, 4>}, {pipeline_mode = #tpu.pipeline_mode<synchronous>, transform_indices = @transform_1, window_bounds = array<i64: 3, 3, 4>}, {pipeline_mode = #tpu.pipeline_mode<synchronous>, transform_indices = @transform_2, window_bounds = array<i64: 4, 128>}, {pipeline_mode = #tpu.pipeline_mode<synchronous>, transform_indices = @transform_3, window_bounds = array<i64: 1, 128>}, {transform_indices = @transform_4, window_bounds = array<i64: 1, 16, 16, 128>}]} {
    %c0 = arith.constant 0 : index
    %c0_0 = arith.constant 0 : index
    %c0_1 = arith.constant 0 : index
    %0 = vector.load %arg3[%c0, %c0_0, %c0_1] : memref<3x3x4xf32, #tpu.memory_space<vmem>>, vector<3x3x4xf32>
    %cst = arith.constant 0.000000e+00 : f32
    %1 = vector.broadcast %cst : f32 to vector<16x16x4xf32>
    %c0_2 = arith.constant 0 : index
    %c0_3 = arith.constant 0 : index
    %c0_4 = arith.constant 0 : index
    %c0_5 = arith.constant 0 : index
    %c0_6 = arith.constant 0 : index
    %2 = vector.load %arg2[%c0_2, %c0_3, %c0_4, %c0_5, %c0_6] : memref<1x1x18x18x4xf32, #tpu.memory_space<vmem>>, vector<1x1x18x16x4xf32>
    %3 = vector.shape_cast %2 : vector<1x1x18x16x4xf32> to vector<18x16x4xf32>
    %4 = vector.extract_strided_slice %3 {offsets = [0, 0, 0], sizes = [16, 16, 4], strides = [1, 1, 1]} : vector<18x16x4xf32> to vector<16x16x4xf32>
    %5 = vector.extract_strided_slice %0 {offsets = [0, 0, 0], sizes = [1, 1, 4], strides = [1, 1, 1]} : vector<3x3x4xf32> to vector<1x1x4xf32>
    %6 = vector.shape_cast %5 : vector<1x1x4xf32> to vector<4xf32>
    %7 = vector.shape_cast %6 : vector<4xf32> to vector<1x1x4xf32>
    %8 = vector.broadcast %7 : vector<1x1x4xf32> to vector<16x16x4xf32>
    %9 = arith.mulf %4, %8 : vector<16x16x4xf32>
    %10 = arith.addf %1, %9 : vector<16x16x4xf32>
    %11 = vector.extract_strided_slice %3 {offsets = [1, 0, 0], sizes = [16, 16, 4], strides = [1, 1, 1]} : vector<18x16x4xf32> to vector<16x16x4xf32>
    %12 = vector.extract_strided_slice %0 {offsets = [1, 0, 0], sizes = [1, 1, 4], strides = [1, 1, 1]} : vector<3x3x4xf32> to vector<1x1x4xf32>
    %13 = vector.shape_cast %12 : vector<1x1x4xf32> to vector<4xf32>
    %14 = vector.shape_cast %13 : vector<4xf32> to vector<1x1x4xf32>
    %15 = vector.broadcast %14 : vector<1x1x4xf32> to vector<16x16x4xf32>
    %16 = arith.mulf %11, %15 : vector<16x16x4xf32>
    %17 = arith.addf %10, %16 : vector<16x16x4xf32>
    %18 = vector.extract_strided_slice %3 {offsets = [2, 0, 0], sizes = [16, 16, 4], strides = [1, 1, 1]} : vector<18x16x4xf32> to vector<16x16x4xf32>
    %19 = vector.extract_strided_slice %0 {offsets = [2, 0, 0], sizes = [1, 1, 4], strides = [1, 1, 1]} : vector<3x3x4xf32> to vector<1x1x4xf32>
    %20 = vector.shape_cast %19 : vector<1x1x4xf32> to vector<4xf32>
    %21 = vector.shape_cast %20 : vector<4xf32> to vector<1x1x4xf32>
    %22 = vector.broadcast %21 : vector<1x1x4xf32> to vector<16x16x4xf32>
    %23 = arith.mulf %18, %22 : vector<16x16x4xf32>
    %24 = arith.addf %17, %23 : vector<16x16x4xf32>
    %c0_7 = arith.constant 0 : index
    %c0_8 = arith.constant 0 : index
    %c0_9 = arith.constant 0 : index
    %c1 = arith.constant 1 : index
    %c0_10 = arith.constant 0 : index
    %25 = vector.load %arg2[%c0_7, %c0_8, %c0_9, %c1, %c0_10] : memref<1x1x18x18x4xf32, #tpu.memory_space<vmem>>, vector<1x1x18x16x4xf32>
    %26 = vector.shape_cast %25 : vector<1x1x18x16x4xf32> to vector<18x16x4xf32>
    %27 = vector.extract_strided_slice %26 {offsets = [0, 0, 0], sizes = [16, 16, 4], strides = [1, 1, 1]} : vector<18x16x4xf32> to vector<16x16x4xf32>
    %28 = vector.extract_strided_slice %0 {offsets = [0, 1, 0], sizes = [1, 1, 4], strides = [1, 1, 1]} : vector<3x3x4xf32> to vector<1x1x4xf32>
    %29 = vector.shape_cast %28 : vector<1x1x4xf32> to vector<4xf32>
    %30 = vector.shape_cast %29 : vector<4xf32> to vector<1x1x4xf32>
    %31 = vector.broadcast %30 : vector<1x1x4xf32> to vector<16x16x4xf32>
    %32 = arith.mulf %27, %31 : vector<16x16x4xf32>
    %33 = arith.addf %24, %32 : vector<16x16x4xf32>
    %34 = vector.extract_strided_slice %26 {offsets = [1, 0, 0], sizes = [16, 16, 4], strides = [1, 1, 1]} : vector<18x16x4xf32> to vector<16x16x4xf32>
    %35 = vector.extract_strided_slice %0 {offsets = [1, 1, 0], sizes = [1, 1, 4], strides = [1, 1, 1]} : vector<3x3x4xf32> to vector<1x1x4xf32>
    %36 = vector.shape_cast %35 : vector<1x1x4xf32> to vector<4xf32>
    %37 = vector.shape_cast %36 : vector<4xf32> to vector<1x1x4xf32>
    %38 = vector.broadcast %37 : vector<1x1x4xf32> to vector<16x16x4xf32>
    %39 = arith.mulf %34, %38 : vector<16x16x4xf32>
    %40 = arith.addf %33, %39 : vector<16x16x4xf32>
    %41 = vector.extract_strided_slice %26 {offsets = [2, 0, 0], sizes = [16, 16, 4], strides = [1, 1, 1]} : vector<18x16x4xf32> to vector<16x16x4xf32>
    %42 = vector.extract_strided_slice %0 {offsets = [2, 1, 0], sizes = [1, 1, 4], strides = [1, 1, 1]} : vector<3x3x4xf32> to vector<1x1x4xf32>
    %43 = vector.shape_cast %42 : vector<1x1x4xf32> to vector<4xf32>
    %44 = vector.shape_cast %43 : vector<4xf32> to vector<1x1x4xf32>
    %45 = vector.broadcast %44 : vector<1x1x4xf32> to vector<16x16x4xf32>
    %46 = arith.mulf %41, %45 : vector<16x16x4xf32>
    %47 = arith.addf %40, %46 : vector<16x16x4xf32>
    %c0_11 = arith.constant 0 : index
    %c0_12 = arith.constant 0 : index
    %c0_13 = arith.constant 0 : index
    %c2 = arith.constant 2 : index
    %c0_14 = arith.constant 0 : index
    %48 = vector.load %arg2[%c0_11, %c0_12, %c0_13, %c2, %c0_14] : memref<1x1x18x18x4xf32, #tpu.memory_space<vmem>>, vector<1x1x18x16x4xf32>
    %49 = vector.shape_cast %48 : vector<1x1x18x16x4xf32> to vector<18x16x4xf32>
    %50 = vector.extract_strided_slice %49 {offsets = [0, 0, 0], sizes = [16, 16, 4], strides = [1, 1, 1]} : vector<18x16x4xf32> to vector<16x16x4xf32>
    %51 = vector.extract_strided_slice %0 {offsets = [0, 2, 0], sizes = [1, 1, 4], strides = [1, 1, 1]} : vector<3x3x4xf32> to vector<1x1x4xf32>
    %52 = vector.shape_cast %51 : vector<1x1x4xf32> to vector<4xf32>
    %53 = vector.shape_cast %52 : vector<4xf32> to vector<1x1x4xf32>
    %54 = vector.broadcast %53 : vector<1x1x4xf32> to vector<16x16x4xf32>
    %55 = arith.mulf %50, %54 : vector<16x16x4xf32>
    %56 = arith.addf %47, %55 : vector<16x16x4xf32>
    %57 = vector.extract_strided_slice %49 {offsets = [1, 0, 0], sizes = [16, 16, 4], strides = [1, 1, 1]} : vector<18x16x4xf32> to vector<16x16x4xf32>
    %58 = vector.extract_strided_slice %0 {offsets = [1, 2, 0], sizes = [1, 1, 4], strides = [1, 1, 1]} : vector<3x3x4xf32> to vector<1x1x4xf32>
    %59 = vector.shape_cast %58 : vector<1x1x4xf32> to vector<4xf32>
    %60 = vector.shape_cast %59 : vector<4xf32> to vector<1x1x4xf32>
    %61 = vector.broadcast %60 : vector<1x1x4xf32> to vector<16x16x4xf32>
    %62 = arith.mulf %57, %61 : vector<16x16x4xf32>
    %63 = arith.addf %56, %62 : vector<16x16x4xf32>
    %64 = vector.extract_strided_slice %49 {offsets = [2, 0, 0], sizes = [16, 16, 4], strides = [1, 1, 1]} : vector<18x16x4xf32> to vector<16x16x4xf32>
    %65 = vector.extract_strided_slice %0 {offsets = [2, 2, 0], sizes = [1, 1, 4], strides = [1, 1, 1]} : vector<3x3x4xf32> to vector<1x1x4xf32>
    %66 = vector.shape_cast %65 : vector<1x1x4xf32> to vector<4xf32>
    %67 = vector.shape_cast %66 : vector<4xf32> to vector<1x1x4xf32>
    %68 = vector.broadcast %67 : vector<1x1x4xf32> to vector<16x16x4xf32>
    %69 = arith.mulf %64, %68 : vector<16x16x4xf32>
    %70 = arith.addf %63, %69 : vector<16x16x4xf32>
    %71 = vector.shape_cast %70 : vector<16x16x4xf32> to vector<256x4xf32>
    %72 = arith.truncf %71 : vector<256x4xf32> to vector<256x4xbf16>
    %c0_15 = arith.constant 0 : index
    %c0_16 = arith.constant 0 : index
    %73 = vector.load %arg4[%c0_15, %c0_16] : memref<4x128xf32, #tpu.memory_space<vmem>>, vector<4x128xf32>
    %74 = arith.truncf %73 : vector<4x128xf32> to vector<4x128xbf16>
    %cst_17 = arith.constant dense<0.000000e+00> : vector<256x128xf32>
    %75 = tpu.matmul %72, %74, %cst_17 {dimension_numbers = #tpu.dot_dimension_numbers<[1], [0], [0], [1], [0, 0, 1, 1], [], []>} : vector<256x4xbf16>, vector<4x128xbf16>, vector<256x128xf32> -> vector<256x128xf32>
    %c0_18 = arith.constant 0 : index
    %c0_19 = arith.constant 0 : index
    %76 = vector.load %arg5[%c0_18, %c0_19] : memref<1x128xf32, #tpu.memory_space<vmem>>, vector<1x128xf32>
    %77 = vector.shape_cast %76 : vector<1x128xf32> to vector<128xf32>
    %78 = vector.shape_cast %77 : vector<128xf32> to vector<1x128xf32>
    %79 = vector.broadcast %78 : vector<1x128xf32> to vector<256x128xf32>
    %80 = arith.addf %75, %79 : vector<256x128xf32>
    %81 = vector.shape_cast %80 : vector<256x128xf32> to vector<16x16x128xf32>
    %c0_20 = arith.constant 0 : index
    %c0_21 = arith.constant 0 : index
    %c0_22 = arith.constant 0 : index
    %c0_23 = arith.constant 0 : index
    %82 = vector.load %arg6[%c0_20, %c0_21, %c0_22, %c0_23] : memref<1x16x16x128xf32, #tpu.memory_space<vmem>>, vector<1x16x16x128xf32>
    %83 = vector.shape_cast %82 : vector<1x16x16x128xf32> to vector<16x16x128xf32>
    %84 = vector.shape_cast %81 : vector<16x16x128xf32> to vector<1x16x16x128xf32>
    tpu.vector_store %arg6[%c0_20, %c0_21, %c0_22, %c0_23], %84 {strides = array<i32>} : memref<1x16x16x128xf32, #tpu.memory_space<vmem>>, vector<1x16x16x128xf32>,
    return
  }
  func.func @transform_0(%arg0: i32, %arg1: i32) -> (i32, i32, i32, i32, i32) {
    %c0_i32 = arith.constant 0 : i32
    %c0_i32_0 = arith.constant 0 : i32
    %c0_i32_1 = arith.constant 0 : i32
    %c0_i32_2 = arith.constant 0 : i32
    return %arg0, %arg1, %c0_i32, %c0_i32_0, %c0_i32_1 : i32, i32, i32, i32, i32
  }
  func.func @transform_1(%arg0: i32, %arg1: i32) -> (i32, i32, i32) {
    %c0_i32 = arith.constant 0 : i32
    %c0_i32_0 = arith.constant 0 : i32
    %c0_i32_1 = arith.constant 0 : i32
    %c0_i32_2 = arith.constant 0 : i32
    return %c0_i32, %c0_i32_0, %c0_i32_1 : i32, i32, i32
  }
  func.func @transform_2(%arg0: i32, %arg1: i32) -> (i32, i32) {
    %c0_i32 = arith.constant 0 : i32
    %c0_i32_0 = arith.constant 0 : i32
    %c0_i32_1 = arith.constant 0 : i32
    return %c0_i32, %c0_i32_0 : i32, i32
  }
  func.func @transform_3(%arg0: i32, %arg1: i32) -> (i32, i32) {
    %c0_i32 = arith.constant 0 : i32
    %c0_i32_0 = arith.constant 0 : i32
    %c0_i32_1 = arith.constant 0 : i32
    return %c0_i32, %c0_i32_0 : i32, i32
  }
  func.func @transform_4(%arg0: i32, %arg1: i32) -> (i32, i32, i32, i32) {
    %c0_i32 = arith.constant 0 : i32
    %c0_i32_0 = arith.constant 0 : i32
    %c0_i32_1 = arith.constant 0 : i32
    return %arg0, %arg1, %c0_i32, %c0_i32_0 : i32, i32, i32, i32
  }
}

</mosaic_0001>

<llo_original>
// kernel: tpu_custom_call.1
$region0: #{tpu_custom_call.1}
  #allocation0 [shape = 'u32[]', space=smem, size = 0x4, offset = 0x4, fixed_abs, tag = 'smem constant byte address 0x4 - core index']
  #allocation1 [shape = 'u32[144,128]{1,0:T(1,128)}', space=vmem, size = 0x12000, scoped, tag = 'internal scratch']
  %s0 = inlined_call_operand.vmem [shape: f32[2,1,18,18,4], index: 0, kind: input, shape index: {}]
  %s1 = inlined_call_operand.vmem [shape: f32[3,3,4], index: 1, kind: input, shape index: {}]
  %s2 = inlined_call_operand.vmem [shape: f32[4,128], index: 2, kind: input, shape index: {}]
  %s3 = inlined_call_operand.vmem [shape: f32[1,128], index: 3, kind: input, shape index: {}]
  %s4 = inlined_call_operand.hbm [shape: f32[2,16,16,128], index: 4, kind: output, shape index: {}]
  %s5 = sld [smem:[#allocation0]]
  $region49: #{tpu_custom_call.1} parent=0
    _
  %s7 = ssub.s32 1, %s5
  %s8 = scalar_select 0, %s7, %s5
  $region1: #{tpu_custom_call.1} parent=0
    #allocation2 [shape = 'u8[262144]{0}', space=vmem, size = 0x40000, scoped, tag = 'output window, operand 0']
    #allocation3 [shape = 's32[2]{0}', space=sflag, size = 0x8, scoped, tag = 'scoped memory for tpu_custom_call.1']
    %9 = vsyncpa [#allocation3], 0
    %s10 = scalar_lea.sflag [#allocation3], 1
    %11 = vsyncpa %s10, 0
    loop: start=0, step=1, limit=4
    $region2: #{tpu_custom_call.1} parent=1 // loop_pre_header
      _
    $region3: #{tpu_custom_call.1} parent=1 // loop_header
      %s13 = sphi 0, %s17
      %p14 = scmp.ge.s32.totalorder %s13, 4
      %s20 = sphi 0, %s32
      %s21 = sphi 0, %s28
      %s22 = sphi 0, %s20
      %s23 = sphi 0, %s21
      %s24 = sphi 0, %s22
      %s25 = sphi 0, %s23
      %s37 = sphi 0, %s39
      %s40 = sphi 0, %s37
      %s41 = sphi 0, %s40
      %s57 = sphi 0, %s41
      %s61 = sphi 0, %s61
      %s63 = sphi 0, %s61
      %s64 = sphi 0, %s63
      %s78 = sphi 0, %s64
      %s82 = sphi 0, %s82
      %s84 = sphi 0, %s82
      %s85 = sphi 0, %s84
      %s99 = sphi 0, %s85
      %s103 = sphi 0, %s103
      %s105 = sphi 0, %s103
      %s106 = sphi 0, %s105
      %s120 = sphi 0, %s106
      %s128 = sphi 0, %s130
      %s131 = sphi 0, %s128
      %s132 = sphi 0, %s131
      %s148 = sphi 0, %s132
    $region4: #{tpu_custom_call.1} parent=1 // loop_header_branch
      %16 = sbr.rel (%p14) target = $region8
    $region5: #{tpu_custom_call.1} parent=1 // loop_body
      %s18 = ssub.s32 %s13, 1
      %s19 = ssub.s32 %s13, 2
      %s26 = sadd.s32 1, %s21
      %p27 = scmp.ge.s32.totalorder %s26, 1
      %s28 = scalar_select %p27, 0, %s26
      %s29 = sadd.s32 1, %s20
      %s30 = scalar_select %p27, %s29, %s20
      %p31 = scmp.ge.s32.totalorder %s30, 2
      %s32 = scalar_select %p31, 0, %s30
      %s33 = ssub.s32 %s20, %s32
      %s34 = ssub.s32 %s21, %s28
      %s35 = sor.u32 %s33, %s34
      %p36 = scmp.eq.s32.totalorder %s35, 0
      %s38 = sadd.s32 %s37, 1
      %s39 = scalar_select %p36, %s37, %s38
      %p42 = pneg %p36
      %p43 = scmp.eq.s32.totalorder %s13, 1
      %p44 = por %p42, %p43
      %p45 = scmp.ne.s32.totalorder %s37, %s40
      %p46 = scmp.eq.s32.totalorder %s13, 0
      %p47 = por %p45, %p46
      %p48 = scmp.ne.s32.totalorder %s37, %s40
      %p49 = scmp.eq.s32.totalorder %s18, 1
      %p50 = por %p48, %p49
      %p51 = scmp.ne.s32.totalorder %s40, %s41
      %p52 = scmp.eq.s32.totalorder %s18, 0
      %p53 = por %p51, %p52
      %p54 = scmp.ne.s32.totalorder %s40, %s41
      %p55 = scmp.eq.s32.totalorder %s19, 1
      %p56 = por %p54, %p55
      %p58 = scmp.ne.s32.totalorder %s41, %s57
      %p59 = scmp.eq.s32.totalorder %s19, 0
      %p60 = por %p58, %p59
      %s62 = sadd.s32 %s61, 1
      %p65 = scmp.eq.s32.totalorder %s13, 1
      %p66 = scmp.ne.s32.totalorder %s61, %s63
      %p67 = scmp.eq.s32.totalorder %s13, 0
      %p68 = por %p66, %p67
      %p69 = scmp.ne.s32.totalorder %s61, %s63
      %p70 = scmp.eq.s32.totalorder %s18, 1
      %p71 = por %p69, %p70
      %p72 = scmp.ne.s32.totalorder %s63, %s64
      %p73 = scmp.eq.s32.totalorder %s18, 0
      %p74 = por %p72, %p73
      %p75 = scmp.ne.s32.totalorder %s63, %s64
      %p76 = scmp.eq.s32.totalorder %s19, 1
      %p77 = por %p75, %p76
      %p79 = scmp.ne.s32.totalorder %s64, %s78
      %p80 = scmp.eq.s32.totalorder %s19, 0
      %p81 = por %p79, %p80
      %s83 = sadd.s32 %s82, 1
      %p86 = scmp.eq.s32.totalorder %s13, 1
      %p87 = scmp.ne.s32.totalorder %s82, %s84
      %p88 = scmp.eq.s32.totalorder %s13, 0
      %p89 = por %p87, %p88
      %p90 = scmp.ne.s32.totalorder %s82, %s84
      %p91 = scmp.eq.s32.totalorder %s18, 1
      %p92 = por %p90, %p91
      %p93 = scmp.ne.s32.totalorder %s84, %s85
      %p94 = scmp.eq.s32.totalorder %s18, 0
      %p95 = por %p93, %p94
      %p96 = scmp.ne.s32.totalorder %s84, %s85
      %p97 = scmp.eq.s32.totalorder %s19, 1
      %p98 = por %p96, %p97
      %p100 = scmp.ne.s32.totalorder %s85, %s99
      %p101 = scmp.eq.s32.totalorder %s19, 0
      %p102 = por %p100, %p101
      %s104 = sadd.s32 %s103, 1
      %p107 = scmp.eq.s32.totalorder %s13, 1
      %p108 = scmp.ne.s32.totalorder %s103, %s105
      %p109 = scmp.eq.s32.totalorder %s13, 0
      %p110 = por %p108, %p109
      %p111 = scmp.ne.s32.totalorder %s103, %s105
      %p112 = scmp.eq.s32.totalorder %s18, 1
      %p113 = por %p111, %p112
      %p114 = scmp.ne.s32.totalorder %s105, %s106
      %p115 = scmp.eq.s32.totalorder %s18, 0
      %p116 = por %p114, %p115
      %p117 = scmp.ne.s32.totalorder %s105, %s106
      %p118 = scmp.eq.s32.totalorder %s19, 1
      %p119 = por %p117, %p118
      %p121 = scmp.ne.s32.totalorder %s106, %s120
      %p122 = scmp.eq.s32.totalorder %s19, 0
      %p123 = por %p121, %p122
      %s124 = ssub.s32 %s20, %s32
      %s125 = ssub.s32 %s21, %s28
      %s126 = sor.u32 %s124, %s125
      %p127 = scmp.eq.s32.totalorder %s126, 0
      %s129 = sadd.s32 %s128, 1
      %s130 = scalar_select %p127, %s128, %s129
      %p133 = pneg %p127
      %p134 = scmp.eq.s32.totalorder %s13, 1
      %p135 = por %p133, %p134
      %p136 = scmp.ne.s32.totalorder %s128, %s131
      %p137 = scmp.eq.s32.totalorder %s13, 0
      %p138 = por %p136, %p137
      %p139 = scmp.ne.s32.totalorder %s128, %s131
      %p140 = scmp.eq.s32.totalorder %s18, 1
      %p141 = por %p139, %p140
      %p142 = scmp.ne.s32.totalorder %s131, %s132
      %p143 = scmp.eq.s32.totalorder %s18, 0
      %p144 = por %p142, %p143
      %p145 = scmp.ne.s32.totalorder %s131, %s132
      %p146 = scmp.eq.s32.totalorder %s19, 1
      %p147 = por %p145, %p146
      %p149 = scmp.ne.s32.totalorder %s132, %s148
      %p150 = scmp.eq.s32.totalorder %s19, 0
      %p151 = por %p149, %p150
      %p152 = scmp.le.s32.totalorder 1, %s13
      %p153 = scmp.lt.s32.totalorder %s13, 3
      %p154 = pnand %p152, %p153
      %p155 = pneg %p154
      // Predicated region
      $region9: #{tpu_custom_call.1} parent=5 // pred_check
        _
      $region10: #{tpu_custom_call.1} parent=5 // pred_check_branch
        %157 = sbr.rel (%p154) target = $region12
      $region11: #{tpu_custom_call.1} parent=5 // pred_region
        %s158 = ssub.s32 %s13, 1
        // Predicated region
        $region13: #{tpu_custom_call.1} parent=11 // pred_check
          %p159 = pneg %p74
        $region14: #{tpu_custom_call.1} parent=11 // pred_check_branch
          %161 = sbr.rel (%p159) target = $region16
        $region15: #{tpu_custom_call.1} parent=11 // pred_region
          _
        $region16: #{tpu_custom_call.1} parent=11 // pred_fallthru
          _
        // Predicated region
        $region17: #{tpu_custom_call.1} parent=11 // pred_check
          %p162 = pneg %p95
        $region18: #{tpu_custom_call.1} parent=11 // pred_check_branch
          %164 = sbr.rel (%p162) target = $region20
        $region19: #{tpu_custom_call.1} parent=11 // pred_region
          _
        $region20: #{tpu_custom_call.1} parent=11 // pred_fallthru
          _
        // Predicated region
        $region21: #{tpu_custom_call.1} parent=11 // pred_check
          %p165 = pneg %p116
        $region22: #{tpu_custom_call.1} parent=11 // pred_check_branch
          %167 = sbr.rel (%p165) target = $region24
        $region23: #{tpu_custom_call.1} parent=11 // pred_region
          _
        $region24: #{tpu_custom_call.1} parent=11 // pred_fallthru
          _
      $region12: #{tpu_custom_call.1} parent=5 // pred_fallthru
        _
      %p168 = scmp.lt.s32.totalorder %s13, 2
      // Predicated region
      $region25: #{tpu_custom_call.1} parent=5 // pred_check
        %p169 = pneg %p168
      $region26: #{tpu_custom_call.1} parent=5 // pred_check_branch
        %171 = sbr.rel (%p169) target = $region28
      $region27: #{tpu_custom_call.1} parent=5 // pred_region
        // Predicated region
        $region29: #{tpu_custom_call.1} parent=27 // pred_check
          %p172 = pneg %p47
        $region30: #{tpu_custom_call.1} parent=27 // pred_check_branch
          %174 = sbr.rel (%p172) target = $region32
        $region31: #{tpu_custom_call.1} parent=27 // pred_region
          %p175 = scmp.lt.s32.totalorder %s20, 1
          %s176 = scalar_select %p175, %s20, 1
          %p177 = scmp.lt.s32.totalorder %s21, 0
          %s178 = scalar_select %p177, %s21, 0
          %s179 = smul.addr %s178, 54
          %s180 = smul.addr %s176, 54
          %s181 = sadd.s32 %s179, %s180
          %s182 = smul.addr %s181, 8
          %s183 = scalar_lea.vmem %s0, %s182
        $region32: #{tpu_custom_call.1} parent=27 // pred_fallthru
          _
      $region28: #{tpu_custom_call.1} parent=5 // pred_fallthru
        _
      %p184 = scmp.le.s32.totalorder 1, %s13
      %p185 = scmp.lt.s32.totalorder %s13, 3
      %p186 = pnand %p184, %p185
      %p187 = pneg %p186
      // Predicated region
      $region33: #{tpu_custom_call.1} parent=5 // pred_check
        _
      $region34: #{tpu_custom_call.1} parent=5 // pred_check_branch
        %189 = sbr.rel (%p186) target = $region36
      $region35: #{tpu_custom_call.1} parent=5 // pred_region
        %s190 = ssub.s32 %s13, 1
        %p191 = scmp.lt.s32.totalorder %s22, 1
        %s192 = scalar_select %p191, %s22, 1
        %p193 = scmp.lt.s32.totalorder %s23, 0
        %s194 = scalar_select %p193, %s23, 0
        %s195 = smul.addr %s194, 54
        %s196 = smul.addr %s192, 54
        %s197 = sadd.s32 %s195, %s196
        %s198 = smul.addr %s197, 8
        %s199 = scalar_lea.vmem %s0, %s198
        %p200 = pneg %p53
        %p201 = pneg %p50
        %p202 = pneg %p74
        %p203 = pneg %p71
        %p204 = pneg %p95
        %p205 = pneg %p92
        %p206 = pneg %p116
        %p207 = pneg %p113
        %p208 = pneg %p144
        %p209 = pneg %p141
        %s210 = sand.u32 %s131, 1
        %s211 = scalar_lea.sflag [#allocation3], %s210
        %s212 = sand.u32 %s131, 1
        %s213 = smul.addr %s212, 256
        %s214 = scalar_lea.vmem [#allocation2], %s213
        %p215 = scmp.lt.s32.totalorder %s22, 1
        %s216 = scalar_select %p215, %s22, 1
        %p217 = scmp.lt.s32.totalorder %s23, 0
        %s218 = scalar_select %p217, %s23, 0
        %s219 = smul.addr %s218, 54
        %s220 = smul.addr %s216, 54
        %s221 = sadd.s32 %s219, %s220
        %s222 = smul.addr %s221, 8
        %s223 = scalar_lea.vmem %s0, %s222
        %s224 = smul.u32 16, %s23
        %v226 = vld [vmem:[%s1] sm:$0x7]
        %v227 = vld [vmem:[%s1 + $0x4] sm:$0x7]
        %v228 = vld [vmem:[%s1 + $0x8] sm:$0x7]
        %v229 = vld [vmem:[%s223] sm:$0xff]
        %v230 = vld [vmem:[%s223 + $0x8] sm:$0xff]
        %v231 = vld [vmem:[%s223 + $0x18] sm:$0xff]
        %v232 = vld [vmem:[%s223 + $0x20] sm:$0xff]
        %v233 = vld [vmem:[%s223 + $0x30] sm:$0xff]
        %v234 = vld [vmem:[%s223 + $0x38] sm:$0xff]
        %v235 = vld [vmem:[%s223 + $0x48] sm:$0xff]
        %v236 = vld [vmem:[%s223 + $0x50] sm:$0xff]
        %v237 = vld [vmem:[%s223 + $0x60] sm:$0xff]
        %v238 = vld [vmem:[%s223 + $0x68] sm:$0xff]
        %v239 = vld [vmem:[%s223 + $0x78] sm:$0xff]
        %v240 = vld [vmem:[%s223 + $0x80] sm:$0xff]
        %v241 = vld [vmem:[%s223 + $0x90] sm:$0xff]
        %v242 = vld [vmem:[%s223 + $0x98] sm:$0xff]
        %v243 = vld [vmem:[%s223 + $0xa8] sm:$0xff]
        %v244 = vld [vmem:[%s223 + $0xb0] sm:$0xff]
        %v245 = vld [vmem:[%s223 + $0xc0] sm:$0xff]
        %v246 = vld [vmem:[%s223 + $0xc8] sm:$0xff]
        %v247 = vld [vmem:[%s223 + $0xd8] sm:$0xff]
        %v248 = vld [vmem:[%s223 + $0xe0] sm:$0xff]
        %v249 = vld [vmem:[%s223 + $0xf0] sm:$0xff]
        %v250 = vld [vmem:[%s223 + $0xf8] sm:$0xff]
        %v251 = vld [vmem:[%s223 + $0x108] sm:$0xff]
        %v252 = vld [vmem:[%s223 + $0x110] sm:$0xff]
        %v253 = vld [vmem:[%s223 + $0x120] sm:$0xff]
        %v254 = vld [vmem:[%s223 + $0x128] sm:$0xff]
        %v255 = vld [vmem:[%s223 + $0x138] sm:$0xff]
        %v256 = vld [vmem:[%s223 + $0x140] sm:$0xff]
        %v257 = vld [vmem:[%s223 + $0x150] sm:$0xff]
        %v258 = vld [vmem:[%s223 + $0x158] sm:$0xff]
        %v259 = vld [vmem:[%s223 + $0x168] sm:$0xff]
        %v260 = vld [vmem:[%s223 + $0x170] sm:$0xff]
        %v261 = vld [vmem:[%s223 + $0x180] sm:$0xff]
        %v262 = vld [vmem:[%s223 + $0x188] sm:$0xff]
        %v263 = vld [vmem:[%s223 + $0x198] sm:$0xff]
        %v264 = vld [vmem:[%s223 + $0x1a0] sm:$0xff]
        %v265 = vlaneseq
        %v266 = vshrl.u32 %v265, 7
        %v267 = vsub.s32 0, %v266
        %v268 = vrot.slane %v226, %v267
        %v269 = vmul.f32 %v229, %v268
        %v270 = vmul.f32 %v230, %v268
        %v271 = vmul.f32 %v231, %v268
        %v272 = vmul.f32 %v232, %v268
        %v273 = vmul.f32 %v233, %v268
        %v274 = vmul.f32 %v234, %v268
        %v275 = vmul.f32 %v235, %v268
        %v276 = vmul.f32 %v236, %v268
        %v277 = vmul.f32 %v237, %v268
        %v278 = vmul.f32 %v238, %v268
        %v279 = vmul.f32 %v239, %v268
        %v280 = vmul.f32 %v240, %v268
        %v281 = vmul.f32 %v241, %v268
        %v282 = vmul.f32 %v242, %v268
        %v283 = vmul.f32 %v243, %v268
        %v284 = vmul.f32 %v244, %v268
        %v285 = vmul.f32 %v245, %v268
        %v286 = vmul.f32 %v246, %v268
        %v287 = vmul.f32 %v247, %v268
        %v288 = vmul.f32 %v248, %v268
        %v289 = vmul.f32 %v249, %v268
        %v290 = vmul.f32 %v250, %v268
        %v291 = vmul.f32 %v251, %v268
        %v292 = vmul.f32 %v252, %v268
        %v293 = vmul.f32 %v253, %v268
        %v294 = vmul.f32 %v254, %v268
        %v295 = vmul.f32 %v255, %v268
        %v296 = vmul.f32 %v256, %v268
        %v297 = vmul.f32 %v257, %v268
        %v298 = vmul.f32 %v258, %v268
        %v299 = vmul.f32 %v259, %v268
        %v300 = vmul.f32 %v260, %v268
        %v301 = vadd.f32 %v269, 0.0
        %v302 = vadd.f32 %v270, 0.0
        %v303 = vadd.f32 %v271, 0.0
        %v304 = vadd.f32 %v272, 0.0
        %v305 = vadd.f32 %v273, 0.0
        %v306 = vadd.f32 %v274, 0.0
        %v307 = vadd.f32 %v275, 0.0
        %v308 = vadd.f32 %v276, 0.0
        %v309 = vadd.f32 %v277, 0.0
        %v310 = vadd.f32 %v278, 0.0
        %v311 = vadd.f32 %v279, 0.0
        %v312 = vadd.f32 %v280, 0.0
        %v313 = vadd.f32 %v281, 0.0
        %v314 = vadd.f32 %v282, 0.0
        %v315 = vadd.f32 %v283, 0.0
        %v316 = vadd.f32 %v284, 0.0
        %v317 = vadd.f32 %v285, 0.0
        %v318 = vadd.f32 %v286, 0.0
        %v319 = vadd.f32 %v287, 0.0
        %v320 = vadd.f32 %v288, 0.0
        %v321 = vadd.f32 %v289, 0.0
        %v322 = vadd.f32 %v290, 0.0
        %v323 = vadd.f32 %v291, 0.0
        %v324 = vadd.f32 %v292, 0.0
        %v325 = vadd.f32 %v293, 0.0
        %v326 = vadd.f32 %v294, 0.0
        %v327 = vadd.f32 %v295, 0.0
        %v328 = vadd.f32 %v296, 0.0
        %v329 = vadd.f32 %v297, 0.0
        %v330 = vadd.f32 %v298, 0.0
        %v331 = vadd.f32 %v299, 0.0
        %v332 = vadd.f32 %v300, 0.0
        %v333 = vlaneseq
        %v334 = vshrl.u32 %v333, 7
        %v335 = vsub.s32 0, %v334
        %v336 = vrot.slane %v227, %v335
        %v337 = vmul.f32 %v231, %v336
        %v338 = vmul.f32 %v232, %v336
        %v339 = vmul.f32 %v233, %v336
        %v340 = vmul.f32 %v234, %v336
        %v341 = vmul.f32 %v235, %v336
        %v342 = vmul.f32 %v236, %v336
        %v343 = vmul.f32 %v237, %v336
        %v344 = vmul.f32 %v238, %v336
        %v345 = vmul.f32 %v239, %v336
        %v346 = vmul.f32 %v240, %v336
        %v347 = vmul.f32 %v241, %v336
        %v348 = vmul.f32 %v242, %v336
        %v349 = vmul.f32 %v243, %v336
        %v350 = vmul.f32 %v244, %v336
        %v351 = vmul.f32 %v245, %v336
        %v352 = vmul.f32 %v246, %v336
        %v353 = vmul.f32 %v247, %v336
        %v354 = vmul.f32 %v248, %v336
        %v355 = vmul.f32 %v249, %v336
        %v356 = vmul.f32 %v250, %v336
        %v357 = vmul.f32 %v251, %v336
        %v358 = vmul.f32 %v252, %v336
        %v359 = vmul.f32 %v253, %v336
        %v360 = vmul.f32 %v254, %v336
        %v361 = vmul.f32 %v255, %v336
        %v362 = vmul.f32 %v256, %v336
        %v363 = vmul.f32 %v257, %v336
        %v364 = vmul.f32 %v258, %v336
        %v365 = vmul.f32 %v259, %v336
        %v366 = vmul.f32 %v260, %v336
        %v367 = vmul.f32 %v261, %v336
        %v368 = vmul.f32 %v262, %v336
        %v369 = vadd.f32 %v301, %v337
        %v370 = vadd.f32 %v302, %v338
        %v371 = vadd.f32 %v303, %v339
        %v372 = vadd.f32 %v304, %v340
        %v373 = vadd.f32 %v305, %v341
        %v374 = vadd.f32 %v306, %v342
        %v375 = vadd.f32 %v307, %v343
        %v376 = vadd.f32 %v308, %v344
        %v377 = vadd.f32 %v309, %v345
        %v378 = vadd.f32 %v310, %v346
        %v379 = vadd.f32 %v311, %v347
        %v380 = vadd.f32 %v312, %v348
        %v381 = vadd.f32 %v313, %v349
        %v382 = vadd.f32 %v314, %v350
        %v383 = vadd.f32 %v315, %v351
        %v384 = vadd.f32 %v316, %v352
        %v385 = vadd.f32 %v317, %v353
        %v386 = vadd.f32 %v318, %v354
        %v387 = vadd.f32 %v319, %v355
        %v388 = vadd.f32 %v320, %v356
        %v389 = vadd.f32 %v321, %v357
        %v390 = vadd.f32 %v322, %v358
        %v391 = vadd.f32 %v323, %v359
        %v392 = vadd.f32 %v324, %v360
        %v393 = vadd.f32 %v325, %v361
        %v394 = vadd.f32 %v326, %v362
        %v395 = vadd.f32 %v327, %v363
        %v396 = vadd.f32 %v328, %v364
        %v397 = vadd.f32 %v329, %v365
        %v398 = vadd.f32 %v330, %v366
        %v399 = vadd.f32 %v331, %v367
        %v400 = vadd.f32 %v332, %v368
        %v401 = vlaneseq
        %v402 = vshrl.u32 %v401, 7
        %v403 = vsub.s32 0, %v402
        %v404 = vrot.slane %v228, %v403
        %v405 = vmul.f32 %v233, %v404
        %v406 = vmul.f32 %v234, %v404
        %v407 = vmul.f32 %v235, %v404
        %v408 = vmul.f32 %v236, %v404
        %v409 = vmul.f32 %v237, %v404
        %v410 = vmul.f32 %v238, %v404
        %v411 = vmul.f32 %v239, %v404
        %v412 = vmul.f32 %v240, %v404
        %v413 = vmul.f32 %v241, %v404
        %v414 = vmul.f32 %v242, %v404
        %v415 = vmul.f32 %v243, %v404
        %v416 = vmul.f32 %v244, %v404
        %v417 = vmul.f32 %v245, %v404
        %v418 = vmul.f32 %v246, %v404
        %v419 = vmul.f32 %v247, %v404
        %v420 = vmul.f32 %v248, %v404
        %v421 = vmul.f32 %v249, %v404
        %v422 = vmul.f32 %v250, %v404
        %v423 = vmul.f32 %v251, %v404
        %v424 = vmul.f32 %v252, %v404
        %v425 = vmul.f32 %v253, %v404
        %v426 = vmul.f32 %v254, %v404
        %v427 = vmul.f32 %v255, %v404
        %v428 = vmul.f32 %v256, %v404
        %v429 = vmul.f32 %v257, %v404
        %v430 = vmul.f32 %v258, %v404
        %v431 = vmul.f32 %v259, %v404
        %v432 = vmul.f32 %v260, %v404
        %v433 = vmul.f32 %v261, %v404
        %v434 = vmul.f32 %v262, %v404
        %v435 = vmul.f32 %v263, %v404
        %v436 = vmul.f32 %v264, %v404
        %v437 = vadd.f32 %v369, %v405
        %v438 = vadd.f32 %v370, %v406
        %v439 = vadd.f32 %v371, %v407
        %v440 = vadd.f32 %v372, %v408
        %v441 = vadd.f32 %v373, %v409
        %v442 = vadd.f32 %v374, %v410
        %v443 = vadd.f32 %v375, %v411
        %v444 = vadd.f32 %v376, %v412
        %v445 = vadd.f32 %v377, %v413
        %v446 = vadd.f32 %v378, %v414
        %v447 = vadd.f32 %v379, %v415
        %v448 = vadd.f32 %v380, %v416
        %v449 = vadd.f32 %v381, %v417
        %v450 = vadd.f32 %v382, %v418
        %v451 = vadd.f32 %v383, %v419
        %v452 = vadd.f32 %v384, %v420
        %v453 = vadd.f32 %v385, %v421
        %v454 = vadd.f32 %v386, %v422
        %v455 = vadd.f32 %v387, %v423
        %v456 = vadd.f32 %v388, %v424
        %v457 = vadd.f32 %v389, %v425
        %v458 = vadd.f32 %v390, %v426
        %v459 = vadd.f32 %v391, %v427
        %v460 = vadd.f32 %v392, %v428
        %v461 = vadd.f32 %v393, %v429
        %v462 = vadd.f32 %v394, %v430
        %v463 = vadd.f32 %v395, %v431
        %v464 = vadd.f32 %v396, %v432
        %v465 = vadd.f32 %v397, %v433
        %v466 = vadd.f32 %v398, %v434
        %v467 = vadd.f32 %v399, %v435
        %v468 = vadd.f32 %v400, %v436
        %v469 = vld [vmem:[%s223 + $0x1] sm:$0xff]
        %v470 = vld [vmem:[%s223 + $0x9] sm:$0xff]
        %v471 = vld [vmem:[%s223 + $0x19] sm:$0xff]
        %v472 = vld [vmem:[%s223 + $0x21] sm:$0xff]
        %v473 = vld [vmem:[%s223 + $0x31] sm:$0xff]
        %v474 = vld [vmem:[%s223 + $0x39] sm:$0xff]
        %v475 = vld [vmem:[%s223 + $0x49] sm:$0xff]
        %v476 = vld [vmem:[%s223 + $0x51] sm:$0xff]
        %v477 = vld [vmem:[%s223 + $0x61] sm:$0xff]
        %v478 = vld [vmem:[%s223 + $0x69] sm:$0xff]
        %v479 = vld [vmem:[%s223 + $0x79] sm:$0xff]
        %v480 = vld [vmem:[%s223 + $0x81] sm:$0xff]
        %v481 = vld [vmem:[%s223 + $0x91] sm:$0xff]
        %v482 = vld [vmem:[%s223 + $0x99] sm:$0xff]
        %v483 = vld [vmem:[%s223 + $0xa9] sm:$0xff]
        %v484 = vld [vmem:[%s223 + $0xb1] sm:$0xff]
        %v485 = vld [vmem:[%s223 + $0xc1] sm:$0xff]
        %v486 = vld [vmem:[%s223 + $0xc9] sm:$0xff]
        %v487 = vld [vmem:[%s223 + $0xd9] sm:$0xff]
        %v488 = vld [vmem:[%s223 + $0xe1] sm:$0xff]
        %v489 = vld [vmem:[%s223 + $0xf1] sm:$0xff]
        %v490 = vld [vmem:[%s223 + $0xf9] sm:$0xff]
        %v491 = vld [vmem:[%s223 + $0x109] sm:$0xff]
        %v492 = vld [vmem:[%s223 + $0x111] sm:$0xff]
        %v493 = vld [vmem:[%s223 + $0x121] sm:$0xff]
        %v494 = vld [vmem:[%s223 + $0x129] sm:$0xff]
        %v495 = vld [vmem:[%s223 + $0x139] sm:$0xff]
        %v496 = vld [vmem:[%s223 + $0x141] sm:$0xff]
        %v497 = vld [vmem:[%s223 + $0x151] sm:$0xff]
        %v498 = vld [vmem:[%s223 + $0x159] sm:$0xff]
        %v499 = vld [vmem:[%s223 + $0x169] sm:$0xff]
        %v500 = vld [vmem:[%s223 + $0x171] sm:$0xff]
        %v501 = vld [vmem:[%s223 + $0x181] sm:$0xff]
        %v502 = vld [vmem:[%s223 + $0x189] sm:$0xff]
        %v503 = vld [vmem:[%s223 + $0x199] sm:$0xff]
        %v504 = vld [vmem:[%s223 + $0x1a1] sm:$0xff]
        %v505 = vlaneseq
        %v506 = vshrl.u32 %v505, 7
        %v507 = vsub.s32 1, %v506
        %v508 = vrot.slane %v226, %v507
        %v509 = vmul.f32 %v469, %v508
        %v510 = vmul.f32 %v470, %v508
        %v511 = vmul.f32 %v471, %v508
        %v512 = vmul.f32 %v472, %v508
        %v513 = vmul.f32 %v473, %v508
        %v514 = vmul.f32 %v474, %v508
        %v515 = vmul.f32 %v475, %v508
        %v516 = vmul.f32 %v476, %v508
        %v517 = vmul.f32 %v477, %v508
        %v518 = vmul.f32 %v478, %v508
        %v519 = vmul.f32 %v479, %v508
        %v520 = vmul.f32 %v480, %v508
        %v521 = vmul.f32 %v481, %v508
        %v522 = vmul.f32 %v482, %v508
        %v523 = vmul.f32 %v483, %v508
        %v524 = vmul.f32 %v484, %v508
        %v525 = vmul.f32 %v485, %v508
        %v526 = vmul.f32 %v486, %v508
        %v527 = vmul.f32 %v487, %v508
        %v528 = vmul.f32 %v488, %v508
        %v529 = vmul.f32 %v489, %v508
        %v530 = vmul.f32 %v490, %v508
        %v531 = vmul.f32 %v491, %v508
        %v532 = vmul.f32 %v492, %v508
        %v533 = vmul.f32 %v493, %v508
        %v534 = vmul.f32 %v494, %v508
        %v535 = vmul.f32 %v495, %v508
        %v536 = vmul.f32 %v496, %v508
        %v537 = vmul.f32 %v497, %v508
        %v538 = vmul.f32 %v498, %v508
        %v539 = vmul.f32 %v499, %v508
        %v540 = vmul.f32 %v500, %v508
        %v541 = vadd.f32 %v437, %v509
        %v542 = vadd.f32 %v438, %v510
        %v543 = vadd.f32 %v439, %v511
        %v544 = vadd.f32 %v440, %v512
        %v545 = vadd.f32 %v441, %v513
        %v546 = vadd.f32 %v442, %v514
        %v547 = vadd.f32 %v443, %v515
        %v548 = vadd.f32 %v444, %v516
        %v549 = vadd.f32 %v445, %v517
        %v550 = vadd.f32 %v446, %v518
        %v551 = vadd.f32 %v447, %v519
        %v552 = vadd.f32 %v448, %v520
        %v553 = vadd.f32 %v449, %v521
        %v554 = vadd.f32 %v450, %v522
        %v555 = vadd.f32 %v451, %v523
        %v556 = vadd.f32 %v452, %v524
        %v557 = vadd.f32 %v453, %v525
        %v558 = vadd.f32 %v454, %v526
        %v559 = vadd.f32 %v455, %v527
        %v560 = vadd.f32 %v456, %v528
        %v561 = vadd.f32 %v457, %v529
        %v562 = vadd.f32 %v458, %v530
        %v563 = vadd.f32 %v459, %v531
        %v564 = vadd.f32 %v460, %v532
        %v565 = vadd.f32 %v461, %v533
        %v566 = vadd.f32 %v462, %v534
        %v567 = vadd.f32 %v463, %v535
        %v568 = vadd.f32 %v464, %v536
        %v569 = vadd.f32 %v465, %v537
        %v570 = vadd.f32 %v466, %v538
        %v571 = vadd.f32 %v467, %v539
        %v572 = vadd.f32 %v468, %v540
        %v573 = vlaneseq
        %v574 = vshrl.u32 %v573, 7
        %v575 = vsub.s32 1, %v574
        %v576 = vrot.slane %v227, %v575
        %v577 = vmul.f32 %v471, %v576
        %v578 = vmul.f32 %v472, %v576
        %v579 = vmul.f32 %v473, %v576
        %v580 = vmul.f32 %v474, %v576
        %v581 = vmul.f32 %v475, %v576
        %v582 = vmul.f32 %v476, %v576
        %v583 = vmul.f32 %v477, %v576
        %v584 = vmul.f32 %v478, %v576
        %v585 = vmul.f32 %v479, %v576
        %v586 = vmul.f32 %v480, %v576
        %v587 = vmul.f32 %v481, %v576
        %v588 = vmul.f32 %v482, %v576
        %v589 = vmul.f32 %v483, %v576
        %v590 = vmul.f32 %v484, %v576
        %v591 = vmul.f32 %v485, %v576
        %v592 = vmul.f32 %v486, %v576
        %v593 = vmul.f32 %v487, %v576
        %v594 = vmul.f32 %v488, %v576
        %v595 = vmul.f32 %v489, %v576
        %v596 = vmul.f32 %v490, %v576
        %v597 = vmul.f32 %v491, %v576
        %v598 = vmul.f32 %v492, %v576
        %v599 = vmul.f32 %v493, %v576
        %v600 = vmul.f32 %v494, %v576
        %v601 = vmul.f32 %v495, %v576
        %v602 = vmul.f32 %v496, %v576
        %v603 = vmul.f32 %v497, %v576
        %v604 = vmul.f32 %v498, %v576
        %v605 = vmul.f32 %v499, %v576
        %v606 = vmul.f32 %v500, %v576
        %v607 = vmul.f32 %v501, %v576
        %v608 = vmul.f32 %v502, %v576
        %v609 = vadd.f32 %v541, %v577
        %v610 = vadd.f32 %v542, %v578
        %v611 = vadd.f32 %v543, %v579
        %v612 = vadd.f32 %v544, %v580
        %v613 = vadd.f32 %v545, %v581
        %v614 = vadd.f32 %v546, %v582
        %v615 = vadd.f32 %v547, %v583
        %v616 = vadd.f32 %v548, %v584
        %v617 = vadd.f32 %v549, %v585
        %v618 = vadd.f32 %v550, %v586
        %v619 = vadd.f32 %v551, %v587
        %v620 = vadd.f32 %v552, %v588
        %v621 = vadd.f32 %v553, %v589
        %v622 = vadd.f32 %v554, %v590
        %v623 = vadd.f32 %v555, %v591
        %v624 = vadd.f32 %v556, %v592
        %v625 = vadd.f32 %v557, %v593
        %v626 = vadd.f32 %v558, %v594
        %v627 = vadd.f32 %v559, %v595
        %v628 = vadd.f32 %v560, %v596
        %v629 = vadd.f32 %v561, %v597
        %v630 = vadd.f32 %v562, %v598
        %v631 = vadd.f32 %v563, %v599
        %v632 = vadd.f32 %v564, %v600
        %v633 = vadd.f32 %v565, %v601
        %v634 = vadd.f32 %v566, %v602
        %v635 = vadd.f32 %v567, %v603
        %v636 = vadd.f32 %v568, %v604
        %v637 = vadd.f32 %v569, %v605
        %v638 = vadd.f32 %v570, %v606
        %v639 = vadd.f32 %v571, %v607
        %v640 = vadd.f32 %v572, %v608
        %v641 = vlaneseq
        %v642 = vshrl.u32 %v641, 7
        %v643 = vsub.s32 1, %v642
        %v644 = vrot.slane %v228, %v643
        %v645 = vmul.f32 %v473, %v644
        %v646 = vmul.f32 %v474, %v644
        %v647 = vmul.f32 %v475, %v644
        %v648 = vmul.f32 %v476, %v644
        %v649 = vmul.f32 %v477, %v644
        %v650 = vmul.f32 %v478, %v644
        %v651 = vmul.f32 %v479, %v644
        %v652 = vmul.f32 %v480, %v644
        %v653 = vmul.f32 %v481, %v644
        %v654 = vmul.f32 %v482, %v644
        %v655 = vmul.f32 %v483, %v644
        %v656 = vmul.f32 %v484, %v644
        %v657 = vmul.f32 %v485, %v644
        %v658 = vmul.f32 %v486, %v644
        %v659 = vmul.f32 %v487, %v644
        %v660 = vmul.f32 %v488, %v644
        %v661 = vmul.f32 %v489, %v644
        %v662 = vmul.f32 %v490, %v644
        %v663 = vmul.f32 %v491, %v644
        %v664 = vmul.f32 %v492, %v644
        %v665 = vmul.f32 %v493, %v644
        %v666 = vmul.f32 %v494, %v644
        %v667 = vmul.f32 %v495, %v644
        %v668 = vmul.f32 %v496, %v644
        %v669 = vmul.f32 %v497, %v644
        %v670 = vmul.f32 %v498, %v644
        %v671 = vmul.f32 %v499, %v644
        %v672 = vmul.f32 %v500, %v644
        %v673 = vmul.f32 %v501, %v644
        %v674 = vmul.f32 %v502, %v644
        %v675 = vmul.f32 %v503, %v644
        %v676 = vmul.f32 %v504, %v644
        %v677 = vadd.f32 %v609, %v645
        %v678 = vadd.f32 %v610, %v646
        %v679 = vadd.f32 %v611, %v647
        %v680 = vadd.f32 %v612, %v648
        %v681 = vadd.f32 %v613, %v649
        %v682 = vadd.f32 %v614, %v650
        %v683 = vadd.f32 %v615, %v651
        %v684 = vadd.f32 %v616, %v652
        %v685 = vadd.f32 %v617, %v653
        %v686 = vadd.f32 %v618, %v654
        %v687 = vadd.f32 %v619, %v655
        %v688 = vadd.f32 %v620, %v656
        %v689 = vadd.f32 %v621, %v657
        %v690 = vadd.f32 %v622, %v658
        %v691 = vadd.f32 %v623, %v659
        %v692 = vadd.f32 %v624, %v660
        %v693 = vadd.f32 %v625, %v661
        %v694 = vadd.f32 %v626, %v662
        %v695 = vadd.f32 %v627, %v663
        %v696 = vadd.f32 %v628, %v664
        %v697 = vadd.f32 %v629, %v665
        %v698 = vadd.f32 %v630, %v666
        %v699 = vadd.f32 %v631, %v667
        %v700 = vadd.f32 %v632, %v668
        %v701 = vadd.f32 %v633, %v669
        %v702 = vadd.f32 %v634, %v670
        %v703 = vadd.f32 %v635, %v671
        %v704 = vadd.f32 %v636, %v672
        %v705 = vadd.f32 %v637, %v673
        %v706 = vadd.f32 %v638, %v674
        %v707 = vadd.f32 %v639, %v675
        %v708 = vadd.f32 %v640, %v676
        %v709 = vld [vmem:[%s223 + $0x2] sm:$0xff]
        %v710 = vld [vmem:[%s223 + $0xa] sm:$0xff]
        %v711 = vld [vmem:[%s223 + $0x1a] sm:$0xff]
        %v712 = vld [vmem:[%s223 + $0x22] sm:$0xff]
        %v713 = vld [vmem:[%s223 + $0x32] sm:$0xff]
        %v714 = vld [vmem:[%s223 + $0x3a] sm:$0xff]
        %v715 = vld [vmem:[%s223 + $0x4a] sm:$0xff]
        %v716 = vld [vmem:[%s223 + $0x52] sm:$0xff]
        %v717 = vld [vmem:[%s223 + $0x62] sm:$0xff]
        %v718 = vld [vmem:[%s223 + $0x6a] sm:$0xff]
        %v719 = vld [vmem:[%s223 + $0x7a] sm:$0xff]
        %v720 = vld [vmem:[%s223 + $0x82] sm:$0xff]
        %v721 = vld [vmem:[%s223 + $0x92] sm:$0xff]
        %v722 = vld [vmem:[%s223 + $0x9a] sm:$0xff]
        %v723 = vld [vmem:[%s223 + $0xaa] sm:$0xff]
        %v724 = vld [vmem:[%s223 + $0xb2] sm:$0xff]
        %v725 = vld [vmem:[%s223 + $0xc2] sm:$0xff]
        %v726 = vld [vmem:[%s223 + $0xca] sm:$0xff]
        %v727 = vld [vmem:[%s223 + $0xda] sm:$0xff]
        %v728 = vld [vmem:[%s223 + $0xe2] sm:$0xff]
        %v729 = vld [vmem:[%s223 + $0xf2] sm:$0xff]
        %v730 = vld [vmem:[%s223 + $0xfa] sm:$0xff]
        %v731 = vld [vmem:[%s223 + $0x10a] sm:$0xff]
        %v732 = vld [vmem:[%s223 + $0x112] sm:$0xff]
        %v733 = vld [vmem:[%s223 + $0x122] sm:$0xff]
        %v734 = vld [vmem:[%s223 + $0x12a] sm:$0xff]
        %v735 = vld [vmem:[%s223 + $0x13a] sm:$0xff]
        %v736 = vld [vmem:[%s223 + $0x142] sm:$0xff]
        %v737 = vld [vmem:[%s223 + $0x152] sm:$0xff]
        %v738 = vld [vmem:[%s223 + $0x15a] sm:$0xff]
        %v739 = vld [vmem:[%s223 + $0x16a] sm:$0xff]
        %v740 = vld [vmem:[%s223 + $0x172] sm:$0xff]
        %v741 = vld [vmem:[%s223 + $0x182] sm:$0xff]
        %v742 = vld [vmem:[%s223 + $0x18a] sm:$0xff]
        %v743 = vld [vmem:[%s223 + $0x19a] sm:$0xff]
        %v744 = vld [vmem:[%s223 + $0x1a2] sm:$0xff]
        %v745 = vlaneseq
        %v746 = vshrl.u32 %v745, 7
        %v747 = vsub.s32 2, %v746
        %v748 = vrot.slane %v226, %v747
        %v749 = vmul.f32 %v709, %v748
        %v750 = vmul.f32 %v710, %v748
        %v751 = vmul.f32 %v711, %v748
        %v752 = vmul.f32 %v712, %v748
        %v753 = vmul.f32 %v713, %v748
        %v754 = vmul.f32 %v714, %v748
        %v755 = vmul.f32 %v715, %v748
        %v756 = vmul.f32 %v716, %v748
        %v757 = vmul.f32 %v717, %v748
        %v758 = vmul.f32 %v718, %v748
        %v759 = vmul.f32 %v719, %v748
        %v760 = vmul.f32 %v720, %v748
        %v761 = vmul.f32 %v721, %v748
        %v762 = vmul.f32 %v722, %v748
        %v763 = vmul.f32 %v723, %v748
        %v764 = vmul.f32 %v724, %v748
        %v765 = vmul.f32 %v725, %v748
        %v766 = vmul.f32 %v726, %v748
        %v767 = vmul.f32 %v727, %v748
        %v768 = vmul.f32 %v728, %v748
        %v769 = vmul.f32 %v729, %v748
        %v770 = vmul.f32 %v730, %v748
        %v771 = vmul.f32 %v731, %v748
        %v772 = vmul.f32 %v732, %v748
        %v773 = vmul.f32 %v733, %v748
        %v774 = vmul.f32 %v734, %v748
        %v775 = vmul.f32 %v735, %v748
        %v776 = vmul.f32 %v736, %v748
        %v777 = vmul.f32 %v737, %v748
        %v778 = vmul.f32 %v738, %v748
        %v779 = vmul.f32 %v739, %v748
        %v780 = vmul.f32 %v740, %v748
        %v781 = vadd.f32 %v677, %v749
        %v782 = vadd.f32 %v678, %v750
        %v783 = vadd.f32 %v679, %v751
        %v784 = vadd.f32 %v680, %v752
        %v785 = vadd.f32 %v681, %v753
        %v786 = vadd.f32 %v682, %v754
        %v787 = vadd.f32 %v683, %v755
        %v788 = vadd.f32 %v684, %v756
        %v789 = vadd.f32 %v685, %v757
        %v790 = vadd.f32 %v686, %v758
        %v791 = vadd.f32 %v687, %v759
        %v792 = vadd.f32 %v688, %v760
        %v793 = vadd.f32 %v689, %v761
        %v794 = vadd.f32 %v690, %v762
        %v795 = vadd.f32 %v691, %v763
        %v796 = vadd.f32 %v692, %v764
        %v797 = vadd.f32 %v693, %v765
        %v798 = vadd.f32 %v694, %v766
        %v799 = vadd.f32 %v695, %v767
        %v800 = vadd.f32 %v696, %v768
        %v801 = vadd.f32 %v697, %v769
        %v802 = vadd.f32 %v698, %v770
        %v803 = vadd.f32 %v699, %v771
        %v804 = vadd.f32 %v700, %v772
        %v805 = vadd.f32 %v701, %v773
        %v806 = vadd.f32 %v702, %v774
        %v807 = vadd.f32 %v703, %v775
        %v808 = vadd.f32 %v704, %v776
        %v809 = vadd.f32 %v705, %v777
        %v810 = vadd.f32 %v706, %v778
        %v811 = vadd.f32 %v707, %v779
        %v812 = vadd.f32 %v708, %v780
        %v813 = vlaneseq
        %v814 = vshrl.u32 %v813, 7
        %v815 = vsub.s32 2, %v814
        %v816 = vrot.slane %v227, %v815
        %v817 = vmul.f32 %v711, %v816
        %v818 = vmul.f32 %v712, %v816
        %v819 = vmul.f32 %v713, %v816
        %v820 = vmul.f32 %v714, %v816
        %v821 = vmul.f32 %v715, %v816
        %v822 = vmul.f32 %v716, %v816
        %v823 = vmul.f32 %v717, %v816
        %v824 = vmul.f32 %v718, %v816
        %v825 = vmul.f32 %v719, %v816
        %v826 = vmul.f32 %v720, %v816
        %v827 = vmul.f32 %v721, %v816
        %v828 = vmul.f32 %v722, %v816
        %v829 = vmul.f32 %v723, %v816
        %v830 = vmul.f32 %v724, %v816
        %v831 = vmul.f32 %v725, %v816
        %v832 = vmul.f32 %v726, %v816
        %v833 = vmul.f32 %v727, %v816
        %v834 = vmul.f32 %v728, %v816
        %v835 = vmul.f32 %v729, %v816
        %v836 = vmul.f32 %v730, %v816
        %v837 = vmul.f32 %v731, %v816
        %v838 = vmul.f32 %v732, %v816
        %v839 = vmul.f32 %v733, %v816
        %v840 = vmul.f32 %v734, %v816
        %v841 = vmul.f32 %v735, %v816
        %v842 = vmul.f32 %v736, %v816
        %v843 = vmul.f32 %v737, %v816
        %v844 = vmul.f32 %v738, %v816
        %v845 = vmul.f32 %v739, %v816
        %v846 = vmul.f32 %v740, %v816
        %v847 = vmul.f32 %v741, %v816
        %v848 = vmul.f32 %v742, %v816
        %v849 = vadd.f32 %v781, %v817
        %v850 = vadd.f32 %v782, %v818
        %v851 = vadd.f32 %v783, %v819
        %v852 = vadd.f32 %v784, %v820
        %v853 = vadd.f32 %v785, %v821
        %v854 = vadd.f32 %v786, %v822
        %v855 = vadd.f32 %v787, %v823
        %v856 = vadd.f32 %v788, %v824
        %v857 = vadd.f32 %v789, %v825
        %v858 = vadd.f32 %v790, %v826
        %v859 = vadd.f32 %v791, %v827
        %v860 = vadd.f32 %v792, %v828
        %v861 = vadd.f32 %v793, %v829
        %v862 = vadd.f32 %v794, %v830
        %v863 = vadd.f32 %v795, %v831
        %v864 = vadd.f32 %v796, %v832
        %v865 = vadd.f32 %v797, %v833
        %v866 = vadd.f32 %v798, %v834
        %v867 = vadd.f32 %v799, %v835
        %v868 = vadd.f32 %v800, %v836
        %v869 = vadd.f32 %v801, %v837
        %v870 = vadd.f32 %v802, %v838
        %v871 = vadd.f32 %v803, %v839
        %v872 = vadd.f32 %v804, %v840
        %v873 = vadd.f32 %v805, %v841
        %v874 = vadd.f32 %v806, %v842
        %v875 = vadd.f32 %v807, %v843
        %v876 = vadd.f32 %v808, %v844
        %v877 = vadd.f32 %v809, %v845
        %v878 = vadd.f32 %v810, %v846
        %v879 = vadd.f32 %v811, %v847
        %v880 = vadd.f32 %v812, %v848
        %v881 = vlaneseq
        %v882 = vshrl.u32 %v881, 7
        %v883 = vsub.s32 2, %v882
        %v884 = vrot.slane %v228, %v883
        %v885 = vmul.f32 %v713, %v884
        %v886 = vmul.f32 %v714, %v884
        %v887 = vmul.f32 %v715, %v884
        %v888 = vmul.f32 %v716, %v884
        %v889 = vmul.f32 %v717, %v884
        %v890 = vmul.f32 %v718, %v884
        %v891 = vmul.f32 %v719, %v884
        %v892 = vmul.f32 %v720, %v884
        %v893 = vmul.f32 %v721, %v884
        %v894 = vmul.f32 %v722, %v884
        %v895 = vmul.f32 %v723, %v884
        %v896 = vmul.f32 %v724, %v884
        %v897 = vmul.f32 %v725, %v884
        %v898 = vmul.f32 %v726, %v884
        %v899 = vmul.f32 %v727, %v884
        %v900 = vmul.f32 %v728, %v884
        %v901 = vmul.f32 %v729, %v884
        %v902 = vmul.f32 %v730, %v884
        %v903 = vmul.f32 %v731, %v884
        %v904 = vmul.f32 %v732, %v884
        %v905 = vmul.f32 %v733, %v884
        %v906 = vmul.f32 %v734, %v884
        %v907 = vmul.f32 %v735, %v884
        %v908 = vmul.f32 %v736, %v884
        %v909 = vmul.f32 %v737, %v884
        %v910 = vmul.f32 %v738, %v884
        %v911 = vmul.f32 %v739, %v884
        %v912 = vmul.f32 %v740, %v884
        %v913 = vmul.f32 %v741, %v884
        %v914 = vmul.f32 %v742, %v884
        %v915 = vmul.f32 %v743, %v884
        %v916 = vmul.f32 %v744, %v884
        %v917 = vadd.f32 %v849, %v885
        %v918 = vadd.f32 %v850, %v886
        %v919 = vadd.f32 %v851, %v887
        %v920 = vadd.f32 %v852, %v888
        %v921 = vadd.f32 %v853, %v889
        %v922 = vadd.f32 %v854, %v890
        %v923 = vadd.f32 %v855, %v891
        %v924 = vadd.f32 %v856, %v892
        %v925 = vadd.f32 %v857, %v893
        %v926 = vadd.f32 %v858, %v894
        %v927 = vadd.f32 %v859, %v895
        %v928 = vadd.f32 %v860, %v896
        %v929 = vadd.f32 %v861, %v897
        %v930 = vadd.f32 %v862, %v898
        %v931 = vadd.f32 %v863, %v899
        %v932 = vadd.f32 %v864, %v900
        %v933 = vadd.f32 %v865, %v901
        %v934 = vadd.f32 %v866, %v902
        %v935 = vadd.f32 %v867, %v903
        %v936 = vadd.f32 %v868, %v904
        %v937 = vadd.f32 %v869, %v905
        %v938 = vadd.f32 %v870, %v906
        %v939 = vadd.f32 %v871, %v907
        %v940 = vadd.f32 %v872, %v908
        %v941 = vadd.f32 %v873, %v909
        %v942 = vadd.f32 %v874, %v910
        %v943 = vadd.f32 %v875, %v911
        %v944 = vadd.f32 %v876, %v912
        %v945 = vadd.f32 %v877, %v913
        %v946 = vadd.f32 %v878, %v914
        %v947 = vadd.f32 %v879, %v915
        %v948 = vadd.f32 %v880, %v916
        %v949 = vpack.c.bf16 %v918, %v917
        %v950 = vpack.c.bf16 %v920, %v919
        %v951 = vpack.c.bf16 %v922, %v921
        %v952 = vpack.c.bf16 %v924, %v923
        %v953 = vpack.c.bf16 %v926, %v925
        %v954 = vpack.c.bf16 %v928, %v927
        %v955 = vpack.c.bf16 %v930, %v929
        %v956 = vpack.c.bf16 %v932, %v931
        %v957 = vpack.c.bf16 %v934, %v933
        %v958 = vpack.c.bf16 %v936, %v935
        %v959 = vpack.c.bf16 %v938, %v937
        %v960 = vpack.c.bf16 %v940, %v939
        %v961 = vpack.c.bf16 %v942, %v941
        %v962 = vpack.c.bf16 %v944, %v943
        %v963 = vpack.c.bf16 %v946, %v945
        %v964 = vpack.c.bf16 %v948, %v947
        %v965 = vld [vmem:[%s2] sm:$0xf]
        %v966 = vpack.c.bf16 %v965, %v965
        %v967 = vld [vmem:[%s3] sm:$0x1]
        %v969 = vlaneseq
        %v970 = vshrl.u32 %v969, 7
        %v971 = vsub.s32 0, %v970
        %v972 = vrot.slane %v967, %v971
        %vm974 = vcmask 31744
        %v976 = vsel %vm974, %v949, 0
        %v979 = vsel %vm974, %v950, 0
        %v982 = vsel %vm974, %v951, 0
        %v985 = vsel %vm974, %v952, 0
        %v988 = vsel %vm974, %v953, 0
        %v991 = vsel %vm974, %v954, 0
        %v994 = vsel %vm974, %v955, 0
        %v997 = vsel %vm974, %v956, 0
        %v1000 = vsel %vm974, %v957, 0
        %v1003 = vsel %vm974, %v958, 0
        %v1006 = vsel %vm974, %v959, 0
        %v1009 = vsel %vm974, %v960, 0
        %v1012 = vsel %vm974, %v961, 0
        %v1015 = vsel %vm974, %v962, 0
        %v1018 = vsel %vm974, %v963, 0
        %v1021 = vsel %vm974, %v964, 0
        %vm1023 = vcmask 1041408
        %v1025 = vsel %vm1023, %v966, 0
        %1027 = vmatprep.subr.bf16.mxu0 0
        %1028 = vmatpush1.bf16.msra.mxu0 %v1025
        %1029 = vmatprep.subr.bf16.mxu0 0
        %1030 = vmatpush1.bf16.msra.mxu0 0
        %1031 = vmatprep.subr.bf16.mxu0 0
        %1032 = vmatpush1.bf16.msra.mxu0 0
        %1033 = vmatprep.subr.bf16.mxu0 0
        %1034 = vmatpush1.bf16.msra.mxu0 0
        %1035 = vmatprep.subr.bf16.mxu0 0
        %1036 = vmatpush1.bf16.msra.mxu0 0
        %1037 = vmatprep.subr.bf16.mxu0 0
        %1038 = vmatpush1.bf16.msra.mxu0 0
        %1039 = vmatprep.subr.bf16.mxu0 0
        %1040 = vmatpush1.bf16.msra.mxu0 0
        %1041 = vmatprep.subr.bf16.mxu0 0
        %1042 = vmatpush1.bf16.msra.mxu0 0
        %1043 = vmatprep.subr.bf16.mxu0 0
        %1044 = vmatpush1.bf16.msra.mxu0 0
        %1045 = vmatprep.subr.bf16.mxu0 0
        %1046 = vmatpush1.bf16.msra.mxu0 0
        %1047 = vmatprep.subr.bf16.mxu0 0
        %1048 = vmatpush1.bf16.msra.mxu0 0
        %1049 = vmatprep.subr.bf16.mxu0 0
        %1050 = vmatpush1.bf16.msra.mxu0 0
        %1051 = vmatprep.subr.bf16.mxu0 0
        %1052 = vmatpush1.bf16.msra.mxu0 0
        %1053 = vmatprep.subr.bf16.mxu0 0
        %1054 = vmatpush1.bf16.msra.mxu0 0
        %1055 = vmatprep.subr.bf16.mxu0 0
        %1056 = vmatpush1.bf16.msra.mxu0 0
        %1057 = vmatprep.subr.bf16.mxu0 0
        %1058 = vmatpush1.bf16.msra.mxu0 0
        %1059 = vmatprep.mubr.bf16.mxu0 0
        %1060 = vmatmul.mubr.bf16.gmra.mrb[0].mxu0 %v976
        %v1061 = vpop.f32.mrb[0].mxu0
        %v1062 = vadd.f32 %v972, %v1061
        %v1063 = vpop.f32.mrb[0].mxu0
        %v1064 = vpop.f32.mrb[0].mxu0
        %v1065 = vadd.f32 %v972, %v1064
        %v1066 = vpop.f32.mrb[0].mxu0
        %1067 = vmatprep.mubr.bf16.mxu0 0
        %1068 = vmatmul.mubr.bf16.gmra.mrb[0].mxu0 %v979
        %v1069 = vpop.f32.mrb[0].mxu0
        %v1070 = vadd.f32 %v972, %v1069
        %v1071 = vpop.f32.mrb[0].mxu0
        %v1072 = vpop.f32.mrb[0].mxu0
        %v1073 = vadd.f32 %v972, %v1072
        %v1074 = vpop.f32.mrb[0].mxu0
        %1075 = vmatprep.mubr.bf16.mxu0 0
        %1076 = vmatmul.mubr.bf16.gmra.mrb[0].mxu0 %v982
        %v1077 = vpop.f32.mrb[0].mxu0
        %v1078 = vadd.f32 %v972, %v1077
        %v1079 = vpop.f32.mrb[0].mxu0
        %v1080 = vpop.f32.mrb[0].mxu0
        %v1081 = vadd.f32 %v972, %v1080
        %v1082 = vpop.f32.mrb[0].mxu0
        %1083 = vmatprep.mubr.bf16.mxu0 0
        %1084 = vmatmul.mubr.bf16.gmra.mrb[0].mxu0 %v985
        %v1085 = vpop.f32.mrb[0].mxu0
        %v1086 = vadd.f32 %v972, %v1085
        %v1087 = vpop.f32.mrb[0].mxu0
        %v1088 = vpop.f32.mrb[0].mxu0
        %v1089 = vadd.f32 %v972, %v1088
        %v1090 = vpop.f32.mrb[0].mxu0
        %1091 = vmatprep.mubr.bf16.mxu0 0
        %1092 = vmatmul.mubr.bf16.gmra.mrb[0].mxu0 %v988
        %v1093 = vpop.f32.mrb[0].mxu0
        %v1094 = vadd.f32 %v972, %v1093
        %v1095 = vpop.f32.mrb[0].mxu0
        %v1096 = vpop.f32.mrb[0].mxu0
        %v1097 = vadd.f32 %v972, %v1096
        %v1098 = vpop.f32.mrb[0].mxu0
        %1099 = vmatprep.mubr.bf16.mxu0 0
        %1100 = vmatmul.mubr.bf16.gmra.mrb[0].mxu0 %v991
        %v1101 = vpop.f32.mrb[0].mxu0
        %v1102 = vadd.f32 %v972, %v1101
        %v1103 = vpop.f32.mrb[0].mxu0
        %v1104 = vpop.f32.mrb[0].mxu0
        %v1105 = vadd.f32 %v972, %v1104
        %v1106 = vpop.f32.mrb[0].mxu0
        %1107 = vmatprep.mubr.bf16.mxu0 0
        %1108 = vmatmul.mubr.bf16.gmra.mrb[0].mxu0 %v994
        %v1109 = vpop.f32.mrb[0].mxu0
        %v1110 = vadd.f32 %v972, %v1109
        %v1111 = vpop.f32.mrb[0].mxu0
        %v1112 = vpop.f32.mrb[0].mxu0
        %v1113 = vadd.f32 %v972, %v1112
        %v1114 = vpop.f32.mrb[0].mxu0
        %1115 = vmatprep.mubr.bf16.mxu0 0
        %1116 = vmatmul.mubr.bf16.gmra.mrb[0].mxu0 %v997
        %v1117 = vpop.f32.mrb[0].mxu0
        %v1118 = vadd.f32 %v972, %v1117
        %v1119 = vpop.f32.mrb[0].mxu0
        %v1120 = vpop.f32.mrb[0].mxu0
        %v1121 = vadd.f32 %v972, %v1120
        %v1122 = vpop.f32.mrb[0].mxu0
        %1123 = vmatprep.mubr.bf16.mxu0 0
        %1124 = vmatmul.mubr.bf16.gmra.mrb[0].mxu0 %v1000
        %v1125 = vpop.f32.mrb[0].mxu0
        %v1126 = vadd.f32 %v972, %v1125
        %v1127 = vpop.f32.mrb[0].mxu0
        %v1128 = vpop.f32.mrb[0].mxu0
        %v1129 = vadd.f32 %v972, %v1128
        %v1130 = vpop.f32.mrb[0].mxu0
        %1131 = vmatprep.mubr.bf16.mxu0 0
        %1132 = vmatmul.mubr.bf16.gmra.mrb[0].mxu0 %v1003
        %v1133 = vpop.f32.mrb[0].mxu0
        %v1134 = vadd.f32 %v972, %v1133
        %v1135 = vpop.f32.mrb[0].mxu0
        %v1136 = vpop.f32.mrb[0].mxu0
        %v1137 = vadd.f32 %v972, %v1136
        %v1138 = vpop.f32.mrb[0].mxu0
        %1139 = vmatprep.mubr.bf16.mxu0 0
        %1140 = vmatmul.mubr.bf16.gmra.mrb[0].mxu0 %v1006
        %v1141 = vpop.f32.mrb[0].mxu0
        %v1142 = vadd.f32 %v972, %v1141
        %v1143 = vpop.f32.mrb[0].mxu0
        %v1144 = vpop.f32.mrb[0].mxu0
        %v1145 = vadd.f32 %v972, %v1144
        %v1146 = vpop.f32.mrb[0].mxu0
        %1147 = vmatprep.mubr.bf16.mxu0 0
        %1148 = vmatmul.mubr.bf16.gmra.mrb[0].mxu0 %v1009
        %v1149 = vpop.f32.mrb[0].mxu0
        %v1150 = vadd.f32 %v972, %v1149
        %v1151 = vpop.f32.mrb[0].mxu0
        %v1152 = vpop.f32.mrb[0].mxu0
        %v1153 = vadd.f32 %v972, %v1152
        %v1154 = vpop.f32.mrb[0].mxu0
        %1155 = vmatprep.mubr.bf16.mxu0 0
        %1156 = vmatmul.mubr.bf16.gmra.mrb[0].mxu0 %v1012
        %v1157 = vpop.f32.mrb[0].mxu0
        %v1158 = vadd.f32 %v972, %v1157
        %v1159 = vpop.f32.mrb[0].mxu0
        %v1160 = vpop.f32.mrb[0].mxu0
        %v1161 = vadd.f32 %v972, %v1160
        %v1162 = vpop.f32.mrb[0].mxu0
        %1163 = vmatprep.mubr.bf16.mxu0 0
        %1164 = vmatmul.mubr.bf16.gmra.mrb[0].mxu0 %v1015
        %v1165 = vpop.f32.mrb[0].mxu0
        %v1166 = vadd.f32 %v972, %v1165
        %v1167 = vpop.f32.mrb[0].mxu0
        %v1168 = vpop.f32.mrb[0].mxu0
        %v1169 = vadd.f32 %v972, %v1168
        %v1170 = vpop.f32.mrb[0].mxu0
        %1171 = vmatprep.mubr.bf16.mxu0 0
        %1172 = vmatmul.mubr.bf16.gmra.mrb[0].mxu0 %v1018
        %v1173 = vpop.f32.mrb[0].mxu0
        %v1174 = vadd.f32 %v972, %v1173
        %v1175 = vpop.f32.mrb[0].mxu0
        %v1176 = vpop.f32.mrb[0].mxu0
        %v1177 = vadd.f32 %v972, %v1176
        %v1178 = vpop.f32.mrb[0].mxu0
        %1179 = vmatprep.mubr.bf16.mxu0 0
        %1180 = vmatmul.mubr.bf16.gmra.mrb[0].mxu0 %v1021
        %v1181 = vpop.f32.mrb[0].mxu0
        %v1182 = vadd.f32 %v972, %v1181
        %v1183 = vpop.f32.mrb[0].mxu0
        %v1184 = vpop.f32.mrb[0].mxu0
        %v1185 = vadd.f32 %v972, %v1184
        %v1186 = vpop.f32.mrb[0].mxu0
        %1187 = vdwg.mxu0
        %1188 = vst [vmem:[%s214] sm:$0xff] %v1062
        %1189 = vst [vmem:[%s214 + $0x8] sm:$0xff] %v1065
        %1190 = vst [vmem:[%s214 + $0x10] sm:$0xff] %v1070
        %1191 = vst [vmem:[%s214 + $0x18] sm:$0xff] %v1073
        %1192 = vst [vmem:[%s214 + $0x20] sm:$0xff] %v1078
        %1193 = vst [vmem:[%s214 + $0x28] sm:$0xff] %v1081
        %1194 = vst [vmem:[%s214 + $0x30] sm:$0xff] %v1086
        %1195 = vst [vmem:[%s214 + $0x38] sm:$0xff] %v1089
        %1196 = vst [vmem:[%s214 + $0x40] sm:$0xff] %v1094
        %1197 = vst [vmem:[%s214 + $0x48] sm:$0xff] %v1097
        %1198 = vst [vmem:[%s214 + $0x50] sm:$0xff] %v1102
        %1199 = vst [vmem:[%s214 + $0x58] sm:$0xff] %v1105
        %1200 = vst [vmem:[%s214 + $0x60] sm:$0xff] %v1110
        %1201 = vst [vmem:[%s214 + $0x68] sm:$0xff] %v1113
        %1202 = vst [vmem:[%s214 + $0x70] sm:$0xff] %v1118
        %1203 = vst [vmem:[%s214 + $0x78] sm:$0xff] %v1121
        %1204 = vst [vmem:[%s214 + $0x80] sm:$0xff] %v1126
        %1205 = vst [vmem:[%s214 + $0x88] sm:$0xff] %v1129
        %1206 = vst [vmem:[%s214 + $0x90] sm:$0xff] %v1134
        %1207 = vst [vmem:[%s214 + $0x98] sm:$0xff] %v1137
        %1208 = vst [vmem:[%s214 + $0xa0] sm:$0xff] %v1142
        %1209 = vst [vmem:[%s214 + $0xa8] sm:$0xff] %v1145
        %1210 = vst [vmem:[%s214 + $0xb0] sm:$0xff] %v1150
        %1211 = vst [vmem:[%s214 + $0xb8] sm:$0xff] %v1153
        %1212 = vst [vmem:[%s214 + $0xc0] sm:$0xff] %v1158
        %1213 = vst [vmem:[%s214 + $0xc8] sm:$0xff] %v1161
        %1214 = vst [vmem:[%s214 + $0xd0] sm:$0xff] %v1166
        %1215 = vst [vmem:[%s214 + $0xd8] sm:$0xff] %v1169
        %1216 = vst [vmem:[%s214 + $0xe0] sm:$0xff] %v1174
        %1217 = vst [vmem:[%s214 + $0xe8] sm:$0xff] %v1177
        %1218 = vst [vmem:[%s214 + $0xf0] sm:$0xff] %v1182
        %1219 = vst [vmem:[%s214 + $0xf8] sm:$0xff] %v1185
        %s1220 = sand.u32 %s131, 1
        %s1221 = scalar_lea.sflag [#allocation3], %s1220
        %s1222 = sand.u32 %s131, 1
        %s1223 = smul.addr %s1222, 256
        %s1224 = scalar_lea.vmem [#allocation2], %s1223
        // Predicated region
        $region37: #{tpu_custom_call.1} parent=35 // pred_check
          %p1225 = pneg %p141
        $region38: #{tpu_custom_call.1} parent=35 // pred_check_branch
          %1227 = sbr.rel (%p1225) target = $region40
        $region39: #{tpu_custom_call.1} parent=35 // pred_region
          %s1228 = smul.u32 16, %s23
          %s1230 = ssub.s32 4096, 4096
          %1231 = vsyncadd %s1221, %s1230
          %s1232 = smul.addr %s1228, 2
          %s1233 = smul.addr %s22, 32
          %s1234 = sadd.s32 %s1232, %s1233
          %s1235 = smul.addr %s1234, 128
          %s1236 = scalar_lea.hbm %s4, %s1235
          %s1237 = sshll.u32 %s1224, 4
          %s1238 = int_to_ptr.vmem [resolvable:$true] %s1237
          %1243 = dma.vmem_to_hbm [thread:$0]  %s1238, 4096, %s1236, %s1221, 128, 128, 8
        $region40: #{tpu_custom_call.1} parent=35 // pred_fallthru
          _
      $region36: #{tpu_custom_call.1} parent=5 // pred_fallthru
        _
      %p1244 = scmp.le.s32.totalorder 2, %s13
      // Predicated region
      $region41: #{tpu_custom_call.1} parent=5 // pred_check
        %p1245 = pneg %p1244
      $region42: #{tpu_custom_call.1} parent=5 // pred_check_branch
        %1247 = sbr.rel (%p1245) target = $region44
      $region43: #{tpu_custom_call.1} parent=5 // pred_region
        %s1248 = ssub.s32 %s13, 2
        // Predicated region
        $region45: #{tpu_custom_call.1} parent=43 // pred_check
          %p1249 = pneg %p147
        $region46: #{tpu_custom_call.1} parent=43 // pred_check_branch
          %1251 = sbr.rel (%p1249) target = $region48
        $region47: #{tpu_custom_call.1} parent=43 // pred_region
          %s1252 = sand.u32 %s132, 1
          %s1253 = scalar_lea.sflag [#allocation3], %s1252
          %s1254 = sand.u32 %s132, 1
          %s1255 = smul.addr %s1254, 256
          %s1256 = scalar_lea.vmem [#allocation2], %s1255
          %1257 = dma.done %s1253, 4096
        $region48: #{tpu_custom_call.1} parent=43 // pred_fallthru
          _
      $region44: #{tpu_custom_call.1} parent=5 // pred_fallthru
        _
    $region6: #{tpu_custom_call.1} parent=1 // loop_footer
      %s17 = sadd.s32 1, %s13
    $region7: #{tpu_custom_call.1} parent=1 // loop_footer_branch
      %12 = sbr.rel target = $region3
    $region8: #{tpu_custom_call.1} parent=1 // loop_exit
      _
    %1258 = vsyncpa [#allocation3], 1
    %s1259 = scalar_lea.sflag [#allocation3], 1
    %1260 = vsyncpa %s1259, 1

</llo_original>
